<compile_context>
chip_gen: v7x
topology: tpu7x:2x2x1
jax: 0.10.0
libtpu: 0.0.40
codegen_flags: <defaults>
</compile_context>

<pallas_src>
import math

import jax
import jax.numpy as jnp
from jax import lax
from jax.experimental import pallas as pl
from jax.experimental.pallas import tpu as pltpu


def _decorr_kernel(x_ref, gram_ref, yty_ref):
    """Accumulate Gram = x^T x and YtY = (x*x)^T (x*x) over the N-tile axis."""
    n = pl.program_id(3)

    @pl.when(n == 0)
    def _():
        gram_ref[...] = jnp.zeros_like(gram_ref)
        yty_ref[...] = jnp.zeros_like(yty_ref)

    x = x_ref[0].astype(jnp.float32)                          # (tn, Wc)
    gram_ref[0] += lax.dot_general(
        x, x, (((0,), (0,)), ((), ())), preferred_element_type=jnp.float32)
    y = x * x
    yty_ref[0] += lax.dot_general(
        y, y, (((0,), (0,)), ((), ())), preferred_element_type=jnp.float32)


def _prep_rows(xg, tn_target, row_align):
    """Pick the N-tile size; zero-pad N when no well-shaped divisor exists.

    Zero rows contribute nothing to Gram / YtY and normalisation uses the true
    N, so padding is numerically transparent.
    """
    _, NN, _ = xg.shape
    tn_target = max(row_align, (tn_target // row_align) * row_align)
    if NN <= tn_target:
        return xg, NN, NN                                     # one full-extent tile
    best = 0
    for cand in range(tn_target, row_align - 1, -row_align):
        if NN % cand == 0:
            best = cand
            break
    if best >= max(256, tn_target // 8):
        return xg, NN, best
    pad = (-NN) % tn_target
    xg = jnp.pad(xg, ((0, 0), (0, pad), (0, 0)))
    return xg, NN + pad, tn_target


def _run_decorr(xg, Wc):
    """xg: (G, N, Wtot) slab with Wc | Wtot.  Returns (gram, yty), each of shape
    (G, Wtot // Wc, Wc, Wc):
        gram[g, c] = sum_n x[g, n, c*Wc:(c+1)*Wc]^T @ x[g, n, c*Wc:(c+1)*Wc]
        yty [g, c] = same with x replaced by x*x  (float32 accumulation).
    """
    G, _, Wtot = xg.shape
    assert Wtot % Wc == 0
    C = Wtot // Wc
    itemsize = xg.dtype.itemsize
    row_align = max(8, 32 // itemsize)                 # (8,128) tile; packed dtypes
    # ~1 MiB of input per grid step keeps the pipeline near the HBM roofline.
    tn_target = max(row_align, min(8192, (1 << 20) // (Wc * itemsize)))
    xg, NNp, tn = _prep_rows(xg, tn_target, row_align)
    n_tiles = NNp // tn
    # With a single (group, chunk) the only parallel work is N: split it so a
    # megacore (v7x) can shard the grid across both TensorCores.
    P = 2 if (G * C == 1 and n_tiles >= 2 and n_tiles % 2 == 0) else 1
    nt = n_tiles // P

    def in_map(g, c, p, n):
        return (g, p * nt + n, c)

    def out_map(g, c, p, n):
        return (g * (C * P) + c * P + p, 0, 0)

    flops = 4 * G * NNp * Wtot * Wc                    # two (tn,Wc)^T(tn,Wc) matmuls/step
    bytes_accessed = G * NNp * Wtot * itemsize + 2 * G * C * P * Wc * Wc * 4
    vmem_need = 2 * tn * Wc * itemsize + 4 * Wc * Wc * 4 + (2 << 20)
    vmem_limit = int(min(48 * 1024 * 1024, max(32 * 1024 * 1024, 2 * vmem_need)))

    gram, yty = pl.pallas_call(
        _decorr_kernel,
        out_shape=(jax.ShapeDtypeStruct((G * C * P, Wc, Wc), jnp.float32),
                   jax.ShapeDtypeStruct((G * C * P, Wc, Wc), jnp.float32)),
        grid_spec=pltpu.PrefetchScalarGridSpec(
            num_scalar_prefetch=0,
            grid=(G, C, P, nt),
            in_specs=[pl.BlockSpec((1, tn, Wc), in_map)],
            out_specs=(pl.BlockSpec((1, Wc, Wc), out_map),
                       pl.BlockSpec((1, Wc, Wc), out_map))),
        compiler_params=pltpu.CompilerParams(
            dimension_semantics=("parallel", "parallel", "parallel", "arbitrary"),
            vmem_limit_bytes=vmem_limit),
        cost_estimate=pl.CostEstimate(
            flops=int(flops), transcendentals=0,
            bytes_accessed=int(bytes_accessed)),
    )(xg)
    gram = gram.reshape(G, C, P, Wc, Wc).sum(axis=2)
    yty = yty.reshape(G, C, P, Wc, Wc).sum(axis=2)
    return gram, yty


def _pick_batched_chunk(d, m):
    """Lane-aligned chunk width (columns of the (N, d*m) slab) covering an
    integer number of decorrelation groups, or None if no such packing."""
    total = d * m
    if m % 128 == 0:
        return m
    w = (m * 128) // math.gcd(m, 128)                  # lcm(m, 128)
    if total % w == 0 and w <= 1024:
        return w
    if total <= 1024:
        return total                                   # single full-width chunk
    return None


def _extract_diag_blocks(a, k, m):
    """a: (C, k*m, k*m) -> (C*k, m, m): the k diagonal m x m blocks of each
    chunk, ordered to match the original group index."""
    C = a.shape[0]
    a5 = a.reshape(C, k, m, k, m)
    diag = jnp.diagonal(a5, axis1=1, axis2=3)          # (C, m, m, k)
    return jnp.moveaxis(diag, -1, 1).reshape(C * k, m, m)


def decorr_loss(x, kappa, compute_grad=True, compute_loss=True, batched=False):
    """JAX/Pallas port of DecorrLoss.forward. Returns (grad, corr_loss, whit_loss)."""
    assert kappa is not None, "Specify kappa for loss and gradient computation"
    assert 0.0 <= kappa <= 1.0, "kappa must be between 0 and 1"
    kappa = float(kappa)

    if not compute_grad and not compute_loss:
        return None, None, None

    if not batched:
        d = x.shape[-1]
        x2 = x.reshape(-1, d)                          # (N, d), contiguous (free)
        N = x2.shape[0]
        gram, yty = _run_decorr(x2[None], d)           # (1, 1, d, d)
        gram_b, yty_b = gram[0], yty[0]                # (1, d, d)
        m, n_groups = d, 1
    else:
        B, L, d, m = x.shape
        N = B * L
        n_groups = d
        Wc = _pick_batched_chunk(d, m)
        if Wc is not None:
            # No transpose: free reshape to (N, d*m), lane-dense chunks of Wc.
            x2 = x.reshape(N, d * m)
            gram, yty = _run_decorr(x2[None], Wc)      # (1, C, Wc, Wc)
            k = Wc // m
            gram_b = _extract_diag_blocks(gram[0], k, m)   # (d, m, m)
            yty_b = _extract_diag_blocks(yty[0], k, m)
        else:
            # TODO(synk): group width m does not pack into 128-lane chunks of
            # the flat layout; pay a one-off transpose (extra HBM pass) instead.
            xg = jnp.transpose(x, (2, 0, 1, 3)).reshape(d, N, m)
            gram, yty = _run_decorr(xg, m)             # (d, 1, m, m)
            gram_b, yty_b = gram[:, 0], yty[:, 0]

    inv_n = 1.0 / N
    grad = None
    if compute_grad:
        eye = jnp.eye(m, dtype=bool)
        grad_b = jnp.where(eye,
                           kappa * (gram_b * inv_n - 1.0),
                           (1.0 - kappa) * (gram_b * inv_n))
        grad = grad_b if batched else grad_b[0]

    corr_loss = whit_loss = None
    if compute_loss:
        tr_yty = jnp.diagonal(yty_b, axis1=-2, axis2=-1).sum()
        tr_gram = jnp.diagonal(gram_b, axis1=-2, axis2=-1).sum()
        if kappa < 1.0:
            corr_loss = (jnp.sum(yty_b) - tr_yty) / (n_groups * N * m * m)
        if kappa > 0.0:
            whit_loss = (tr_yty - 2.0 * tr_gram + n_groups * N * m) / (n_groups * N * m)
    return grad, corr_loss, whit_loss


_decorr_loss_jit = jax.jit(decorr_loss, static_argnums=(1, 2, 3, 4))


def decorr_loss_ref(x, kappa, compute_grad, compute_loss, batched):
    """Pure-jnp reference mirroring the PyTorch implementation."""
    if not batched:
        d = x.shape[-1]
        xr = x.reshape(-1, d)
        mean_axis = 0
    else:
        B, L, d, m = x.shape
        xr = jnp.transpose(x, (2, 0, 1, 3)).reshape(d, -1, m)
        mean_axis = 1
    dim = xr.shape[-1]
    C = xr[..., :, None] * xr[..., None, :]
    eye = jnp.eye(dim, dtype=bool)
    V = jnp.diagonal(C, axis1=-2, axis2=-1) - 1.0
    C = jnp.where(eye, 0.0, C)
    grad = None
    if compute_grad:
        unavg = (1.0 - kappa) * C + kappa * (V[..., :, None] * jnp.eye(dim))
        grad = jnp.mean(unavg, axis=mean_axis)
    corr = jnp.mean(C * C) if (compute_loss and kappa < 1.0) else None
    whit = jnp.mean(V * V) if (compute_loss and kappa > 0.0) else None
    return grad, corr, whit


if __name__ == "__main__":
    key = jax.random.PRNGKey(0)
    k1, k2, k3, k4 = jax.random.split(key, 4)
    kappa = 0.5

    def _check(x, kap, batched):
        g, c, w = _decorr_loss_jit(x, kap, True, True, batched)
        jax.block_until_ready([t for t in (g, c, w) if t is not None])
        gr, cr, wr = decorr_loss_ref(x, kap, True, True, batched)
        for a, b in ((g, gr), (c, cr), (w, wr)):
            assert (a is None) == (b is None)
            if a is not None:
                assert jnp.allclose(a, b, atol=1e-3, rtol=1e-3)

    # 1) non-batched (B, L, d): single N tile
    x1 = jax.random.normal(k1, (2, 64, 32), dtype=jnp.float32)
    _check(x1, kappa, False)

    # 2) batched (B, L, d, m) with d*m = 64: one full-width chunk
    x2 = jax.random.normal(k2, (2, 8, 4, 16), dtype=jnp.float32)
    _check(x2, kappa, True)

    # 3) batched with d*m = 256: two lane-dense 128-wide chunks, multi-tile N
    x3 = jax.random.normal(k3, (2, 2048, 16, 16), dtype=jnp.float32)
    _check(x3, kappa, True)

    # 4) non-batched with awkward N = 8248: exercises zero-padding + 2-way N split
    x4 = jax.random.normal(k4, (2, 4124, 32), dtype=jnp.float32)
    _check(x4, kappa, False)

    # kappa edge cases (special-cased in the reference module)
    _check(x1, 0.0, False)
    _check(x1, 1.0, False)

    print("KERNEL_OK")
</pallas_src>

<mosaic_0001>
module attributes {stable_mosaic.version = 11 : i64} {
  func.func @_decorr_kernel(%arg0: i32, %arg1: i32, %arg2: i32, %arg3: i32, %arg4: memref<1x128x32xf32, #tpu.memory_space<vmem>>, %arg5: memref<1x32x32xf32, #tpu.memory_space<vmem>>, %arg6: memref<1x32x32xf32, #tpu.memory_space<vmem>>) attributes {dimension_semantics = [#tpu.dimension_semantics<parallel>, #tpu.dimension_semantics<parallel>, #tpu.dimension_semantics<parallel>, #tpu.dimension_semantics<arbitrary>], iteration_bounds = array<i64: 1, 1, 1, 1>, scalar_prefetch = 0 : i64, scratch_operands = 0 : i64, tpu.core_type = #tpu.core_type<tc>, window_params = [{transform_indices = @transform_0, window_bounds = array<i64: 1, 128, 32>}, {transform_indices = @transform_1, window_bounds = array<i64: 1, 32, 32>}, {transform_indices = @transform_2, window_bounds = array<i64: 1, 32, 32>}]} {
    %c0_i32 = arith.constant 0 : i32
    %0 = arith.cmpi eq, %arg3, %c0_i32 : i32
    %1 = arith.extui %0 : i1 to i32
    %c0_i32_0 = arith.constant 0 : i32
    %2 = arith.cmpi ne, %1, %c0_i32_0 : i32
    scf.if %2 {
      %cst_16 = arith.constant 0.000000e+00 : f32
      %20 = vector.broadcast %cst_16 : f32 to vector<1x32x32xf32>
      %c0_17 = arith.constant 0 : index
      %c0_18 = arith.constant 0 : index
      %c0_19 = arith.constant 0 : index
      %21 = vector.load %arg5[%c0_17, %c0_18, %c0_19] : memref<1x32x32xf32, #tpu.memory_space<vmem>>, vector<1x32x32xf32>
      tpu.vector_store %arg5[%c0_17, %c0_18, %c0_19], %20 {strides = array<i32>} : memref<1x32x32xf32, #tpu.memory_space<vmem>>, vector<1x32x32xf32>,
      %cst_20 = arith.constant 0.000000e+00 : f32
      %22 = vector.broadcast %cst_20 : f32 to vector<1x32x32xf32>
      %c0_21 = arith.constant 0 : index
      %c0_22 = arith.constant 0 : index
      %c0_23 = arith.constant 0 : index
      %23 = vector.load %arg6[%c0_21, %c0_22, %c0_23] : memref<1x32x32xf32, #tpu.memory_space<vmem>>, vector<1x32x32xf32>
      tpu.vector_store %arg6[%c0_21, %c0_22, %c0_23], %22 {strides = array<i32>} : memref<1x32x32xf32, #tpu.memory_space<vmem>>, vector<1x32x32xf32>,
    } else {
    }
    %c0 = arith.constant 0 : index
    %c0_1 = arith.constant 0 : index
    %c0_2 = arith.constant 0 : index
    %3 = vector.load %arg4[%c0, %c0_1, %c0_2] : memref<1x128x32xf32, #tpu.memory_space<vmem>>, vector<1x128x32xf32>
    %4 = vector.shape_cast %3 : vector<1x128x32xf32> to vector<128x32xf32>
    %c0_3 = arith.constant 0 : index
    %c0_4 = arith.constant 0 : index
    %c0_5 = arith.constant 0 : index
    %5 = vector.load %arg5[%c0_3, %c0_4, %c0_5] : memref<1x32x32xf32, #tpu.memory_space<vmem>>, vector<1x32x32xf32>
    %6 = vector.shape_cast %5 : vector<1x32x32xf32> to vector<32x32xf32>
    %cst = arith.constant dense<0.000000e+00> : vector<32x32xf32>
    %7 = tpu.matmul %4, %4, %cst {dimension_numbers = #tpu.dot_dimension_numbers<[0], [0], [1], [1], [0, 1, 1, 1], [], []>} : vector<128x32xf32>, vector<128x32xf32>, vector<32x32xf32> -> vector<32x32xf32>
    %8 = arith.addf %6, %7 : vector<32x32xf32>
    %c0_6 = arith.constant 0 : index
    %c0_7 = arith.constant 0 : index
    %c0_8 = arith.constant 0 : index
    %9 = vector.load %arg5[%c0_6, %c0_7, %c0_8] : memref<1x32x32xf32, #tpu.memory_space<vmem>>, vector<1x32x32xf32>
    %10 = vector.shape_cast %9 : vector<1x32x32xf32> to vector<32x32xf32>
    %11 = vector.shape_cast %8 : vector<32x32xf32> to vector<1x32x32xf32>
    tpu.vector_store %arg5[%c0_6, %c0_7, %c0_8], %11 {strides = array<i32>} : memref<1x32x32xf32, #tpu.memory_space<vmem>>, vector<1x32x32xf32>,
    %12 = arith.mulf %4, %4 : vector<128x32xf32>
    %c0_9 = arith.constant 0 : index
    %c0_10 = arith.constant 0 : index
    %c0_11 = arith.constant 0 : index
    %13 = vector.load %arg6[%c0_9, %c0_10, %c0_11] : memref<1x32x32xf32, #tpu.memory_space<vmem>>, vector<1x32x32xf32>
    %14 = vector.shape_cast %13 : vector<1x32x32xf32> to vector<32x32xf32>
    %cst_12 = arith.constant dense<0.000000e+00> : vector<32x32xf32>
    %15 = tpu.matmul %12, %12, %cst_12 {dimension_numbers = #tpu.dot_dimension_numbers<[0], [0], [1], [1], [0, 1, 1, 1], [], []>} : vector<128x32xf32>, vector<128x32xf32>, vector<32x32xf32> -> vector<32x32xf32>
    %16 = arith.addf %14, %15 : vector<32x32xf32>
    %c0_13 = arith.constant 0 : index
    %c0_14 = arith.constant 0 : index
    %c0_15 = arith.constant 0 : index
    %17 = vector.load %arg6[%c0_13, %c0_14, %c0_15] : memref<1x32x32xf32, #tpu.memory_space<vmem>>, vector<1x32x32xf32>
    %18 = vector.shape_cast %17 : vector<1x32x32xf32> to vector<32x32xf32>
    %19 = vector.shape_cast %16 : vector<32x32xf32> to vector<1x32x32xf32>
    tpu.vector_store %arg6[%c0_13, %c0_14, %c0_15], %19 {strides = array<i32>} : memref<1x32x32xf32, #tpu.memory_space<vmem>>, vector<1x32x32xf32>,
    return
  }
  func.func @transform_0(%arg0: i32, %arg1: i32, %arg2: i32, %arg3: i32) -> (i32, i32, i32) {
    %c1_i32 = arith.constant 1 : i32
    %0 = arith.muli %arg2, %c1_i32 : i32
    %1 = arith.addi %0, %arg3 : i32
    %c0_i32 = arith.constant 0 : i32
    return %arg0, %1, %arg1 : i32, i32, i32
  }
  func.func @transform_1(%arg0: i32, %arg1: i32, %arg2: i32, %arg3: i32) -> (i32, i32, i32) {
    %c1_i32 = arith.constant 1 : i32
    %0 = arith.muli %arg0, %c1_i32 : i32
    %c1_i32_0 = arith.constant 1 : i32
    %1 = arith.muli %arg1, %c1_i32_0 : i32
    %2 = arith.addi %0, %1 : i32
    %3 = arith.addi %2, %arg2 : i32
    %c0_i32 = arith.constant 0 : i32
    %c0_i32_1 = arith.constant 0 : i32
    %c0_i32_2 = arith.constant 0 : i32
    return %3, %c0_i32, %c0_i32_1 : i32, i32, i32
  }
  func.func @transform_2(%arg0: i32, %arg1: i32, %arg2: i32, %arg3: i32) -> (i32, i32, i32) {
    %c1_i32 = arith.constant 1 : i32
    %0 = arith.muli %arg0, %c1_i32 : i32
    %c1_i32_0 = arith.constant 1 : i32
    %1 = arith.muli %arg1, %c1_i32_0 : i32
    %2 = arith.addi %0, %1 : i32
    %3 = arith.addi %2, %arg2 : i32
    %c0_i32 = arith.constant 0 : i32
    %c0_i32_1 = arith.constant 0 : i32
    %c0_i32_2 = arith.constant 0 : i32
    return %3, %c0_i32, %c0_i32_1 : i32, i32, i32
  }
}

</mosaic_0001>

<llo_original>
// kernel: decorr_loss.1
$region0: #{decorr_loss.1}
  #allocation0 [shape = 'u32[]', space=smem, size = 0x4, offset = 0x4, fixed_abs, tag = 'smem constant byte address 0x4 - core index']
  #allocation1 [shape = 'u32[144,128]{1,0:T(1,128)}', space=vmem, size = 0x12000, scoped, tag = 'internal scratch']
  %s0 = inlined_call_operand.vmem [shape: f32[1,128,32], index: 0, kind: input, shape index: {}]
  %s1 = inlined_call_operand.vmem [shape: f32[1,32,32], index: 1, kind: output, shape index: {0}]
  %s2 = inlined_call_operand.vmem [shape: f32[1,32,32], index: 2, kind: output, shape index: {1}]
  %3 = xla_tuple %s1, %s2
  %s4 = sld [smem:[#allocation0]]
  $region26: #{decorr_loss.1} parent=0
    _
  %s6 = ssub.s32 1, %s4
  %s7 = scalar_select 0, %s6, %s4
  // Predicated region
  $region2: #{decorr_loss.1} parent=0 // pred_check
    _
  $region3: #{decorr_loss.1} parent=0 // pred_check_branch
    %9 = sbr.rel (0) target = $region5
  $region4: #{decorr_loss.1} parent=0 // pred_region
    %s10 = sadd.s32 0, 0
    %s11 = smul.u32 16, %s10
    %p12 = scmp.lt.s32.totalorder %s11, 15
    %s13 = scalar_select %p12, %s11, 15
    %s14 = smul.addr %s13, 8
    %s15 = scalar_lea.vmem %s0, %s14
    %s16 = sadd.s32 0, 0
    %s17 = smul.u32 16, %s16
  $region5: #{decorr_loss.1} parent=0 // pred_fallthru
    _
  %s18 = sadd.s32 0, 0
  %s19 = smul.u32 16, %s18
  %p20 = scmp.lt.s32.totalorder %s19, 15
  %s21 = scalar_select %p20, %s19, 15
  %s22 = smul.addr %s21, 8
  %s23 = scalar_lea.vmem %s0, %s22
  %s24 = sadd.s32 0, 0
  %s25 = sadd.s32 %s24, 0
  %p26 = scmp.lt.s32.totalorder %s25, 0
  %s27 = scalar_select %p26, %s25, 0
  %s28 = smul.addr %s27, 4
  %s29 = smul.addr %s28, 8
  %s30 = scalar_lea.vmem %s1, %s29
  %s31 = sadd.s32 0, 0
  %s32 = sadd.s32 %s31, 0
  %p33 = scmp.lt.s32.totalorder %s32, 0
  %s34 = scalar_select %p33, %s32, 0
  %s35 = smul.addr %s34, 4
  %s36 = smul.addr %s35, 8
  %s37 = scalar_lea.vmem %s2, %s36
  %s38 = sadd.s32 0, 0
  %s39 = smul.u32 16, %s38
  %p40 = scmp.lt.s32.totalorder %s39, 15
  %s41 = scalar_select %p40, %s39, 15
  %s42 = smul.addr %s41, 8
  %s43 = scalar_lea.vmem %s0, %s42
  %s44 = sadd.s32 0, 0
  %s45 = smul.u32 16, %s44
  %s46 = sadd.s32 0, 0
  %s47 = sadd.s32 %s46, 0
  %p48 = scmp.lt.s32.totalorder %s47, 0
  %s49 = scalar_select %p48, %s47, 0
  %s50 = smul.addr %s49, 4
  %s51 = smul.addr %s50, 8
  %s52 = scalar_lea.vmem %s1, %s51
  %s53 = sadd.s32 0, 0
  %s54 = sadd.s32 %s53, 0
  %s55 = sadd.s32 0, 0
  %s56 = sadd.s32 %s55, 0
  %p57 = scmp.lt.s32.totalorder %s56, 0
  %s58 = scalar_select %p57, %s56, 0
  %s59 = smul.addr %s58, 4
  %s60 = smul.addr %s59, 8
  %s61 = scalar_lea.vmem %s2, %s60
  %s62 = sadd.s32 0, 0
  %s63 = sadd.s32 %s62, 0
  %p64 = scmp.eq.s32.totalorder 0, 0
  // Predicated region
  $region6: #{decorr_loss.1} parent=0 // pred_check
    %p65 = pneg %p64
  $region7: #{decorr_loss.1} parent=0 // pred_check_branch
    %67 = sbr.rel (%p65) target = $region9
  $region8: #{decorr_loss.1} parent=0 // pred_region
    %vm68 = vcmask 261120
    %69 = vst.msk [vmem:[%s52] sm:$0xff] %vm68, 0.0
    %70 = vst.msk [vmem:[%s52 + $0x8] sm:$0xff] %vm68, 0.0
    %71 = vst.msk [vmem:[%s52 + $0x10] sm:$0xff] %vm68, 0.0
    %72 = vst.msk [vmem:[%s52 + $0x18] sm:$0xff] %vm68, 0.0
    %73 = vst.msk [vmem:[%s61] sm:$0xff] %vm68, 0.0
    %74 = vst.msk [vmem:[%s61 + $0x8] sm:$0xff] %vm68, 0.0
    %75 = vst.msk [vmem:[%s61 + $0x10] sm:$0xff] %vm68, 0.0
    %76 = vst.msk [vmem:[%s61 + $0x18] sm:$0xff] %vm68, 0.0
  $region9: #{decorr_loss.1} parent=0 // pred_fallthru
    _
  %v77 = vld [vmem:[%s43] sm:$0xff]
  %v78 = vld [vmem:[%s43 + $0x8] sm:$0xff]
  %v79 = vld [vmem:[%s43 + $0x10] sm:$0xff]
  %v80 = vld [vmem:[%s43 + $0x18] sm:$0xff]
  %v81 = vld [vmem:[%s43 + $0x20] sm:$0xff]
  %v82 = vld [vmem:[%s43 + $0x28] sm:$0xff]
  %v83 = vld [vmem:[%s43 + $0x30] sm:$0xff]
  %v84 = vld [vmem:[%s43 + $0x38] sm:$0xff]
  %v85 = vld [vmem:[%s43 + $0x40] sm:$0xff]
  %v86 = vld [vmem:[%s43 + $0x48] sm:$0xff]
  %v87 = vld [vmem:[%s43 + $0x50] sm:$0xff]
  %v88 = vld [vmem:[%s43 + $0x58] sm:$0xff]
  %v89 = vld [vmem:[%s43 + $0x60] sm:$0xff]
  %v90 = vld [vmem:[%s43 + $0x68] sm:$0xff]
  %v91 = vld [vmem:[%s43 + $0x70] sm:$0xff]
  %v92 = vld [vmem:[%s43 + $0x78] sm:$0xff]
  %v93 = vld [vmem:[%s52] sm:$0xff]
  %v94 = vld [vmem:[%s52 + $0x8] sm:$0xff]
  %v95 = vld [vmem:[%s52 + $0x10] sm:$0xff]
  %v96 = vld [vmem:[%s52 + $0x18] sm:$0xff]
  %97 = vxpose.xlu0.b32.start [1/16] %v77, 128
  %98 = vxpose.xlu0.b32.cont [2/16] %v78, 128
  %99 = vxpose.xlu0.b32.cont [3/16] %v79, 128
  %100 = vxpose.xlu0.b32.cont [4/16] %v80, 128
  %101 = vxpose.xlu0.b32.cont [5/16] %v81, 128
  %102 = vxpose.xlu0.b32.cont [6/16] %v82, 128
  %103 = vxpose.xlu0.b32.cont [7/16] %v83, 128
  %104 = vxpose.xlu0.b32.cont [8/16] %v84, 128
  %105 = vxpose.xlu0.b32.cont [9/16] %v85, 128
  %106 = vxpose.xlu0.b32.cont [10/16] %v86, 128
  %107 = vxpose.xlu0.b32.cont [11/16] %v87, 128
  %108 = vxpose.xlu0.b32.cont [12/16] %v88, 128
  %109 = vxpose.xlu0.b32.cont [13/16] %v89, 128
  %110 = vxpose.xlu0.b32.cont [14/16] %v90, 128
  %111 = vxpose.xlu0.b32.cont [15/16] %v91, 128
  %112 = vxpose.xlu0.b32.end [16/16] %v92, 128
  %v113 = vpop.trf.xlu0
  %v114 = vpop.trf.xlu0
  %v115 = vpop.trf.xlu0
  %v116 = vpop.trf.xlu0
  %v117 = vpop.trf.xlu0
  %v118 = vpop.trf.xlu0
  %v119 = vpop.trf.xlu0
  %v120 = vpop.trf.xlu0
  %v121 = vpop.trf.xlu0
  %v122 = vpop.trf.xlu0
  %v123 = vpop.trf.xlu0
  %v124 = vpop.trf.xlu0
  %v125 = vpop.trf.xlu0
  %v126 = vpop.trf.xlu0
  %v127 = vpop.trf.xlu0
  %v128 = vpop.trf.xlu0
  %129 = vmatprep.subr.mxu0 0.0
  %130 = vmatpush1.msra.mxu0 %v77
  %131 = vmatprep.subr.mxu0 0.0
  %132 = vmatpush1.msra.mxu0 %v78
  %133 = vmatprep.subr.mxu0 0.0
  %134 = vmatpush1.msra.mxu0 %v79
  %135 = vmatprep.subr.mxu0 0.0
  %136 = vmatpush1.msra.mxu0 %v80
  %137 = vmatprep.subr.mxu0 0.0
  %138 = vmatpush1.msra.mxu0 %v81
  %139 = vmatprep.subr.mxu0 0.0
  %140 = vmatpush1.msra.mxu0 %v82
  %141 = vmatprep.subr.mxu0 0.0
  %142 = vmatpush1.msra.mxu0 %v83
  %143 = vmatprep.subr.mxu0 0.0
  %144 = vmatpush1.msra.mxu0 %v84
  %145 = vmatprep.subr.mxu0 0.0
  %146 = vmatpush1.msra.mxu0 %v85
  %147 = vmatprep.subr.mxu0 0.0
  %148 = vmatpush1.msra.mxu0 %v86
  %149 = vmatprep.subr.mxu0 0.0
  %150 = vmatpush1.msra.mxu0 %v87
  %151 = vmatprep.subr.mxu0 0.0
  %152 = vmatpush1.msra.mxu0 %v88
  %153 = vmatprep.subr.mxu0 0.0
  %154 = vmatpush1.msra.mxu0 %v89
  %155 = vmatprep.subr.mxu0 0.0
  %156 = vmatpush1.msra.mxu0 %v90
  %157 = vmatprep.subr.mxu0 0.0
  %158 = vmatpush1.msra.mxu0 %v91
  %159 = vmatprep.subr.mxu0 0.0
  %160 = vmatpush1.msra.mxu0 %v92
  %161 = vmatprep.subr.mxu0 0.0
  %162 = vmatpush1.msra.mxu0 0.0
  %163 = vmatprep.subr.mxu0 0.0
  %164 = vmatpush1.msra.mxu0 0.0
  %165 = vmatprep.subr.mxu0 0.0
  %166 = vmatpush1.msra.mxu0 0.0
  %167 = vmatprep.subr.mxu0 0.0
  %168 = vmatpush1.msra.mxu0 0.0
  %169 = vmatprep.subr.mxu0 0.0
  %170 = vmatpush1.msra.mxu0 0.0
  %171 = vmatprep.subr.mxu0 0.0
  %172 = vmatpush1.msra.mxu0 0.0
  %173 = vmatprep.subr.mxu0 0.0
  %174 = vmatpush1.msra.mxu0 0.0
  %175 = vmatprep.subr.mxu0 0.0
  %176 = vmatpush1.msra.mxu0 0.0
  %177 = vmatprep.subr.mxu0 0.0
  %178 = vmatpush1.msra.mxu0 0.0
  %179 = vmatprep.subr.mxu0 0.0
  %180 = vmatpush1.msra.mxu0 0.0
  %181 = vmatprep.subr.mxu0 0.0
  %182 = vmatpush1.msra.mxu0 0.0
  %183 = vmatprep.subr.mxu0 0.0
  %184 = vmatpush1.msra.mxu0 0.0
  %185 = vmatprep.subr.mxu0 0.0
  %186 = vmatpush1.msra.mxu0 0.0
  %187 = vmatprep.subr.mxu0 0.0
  %188 = vmatpush1.msra.mxu0 0.0
  %189 = vmatprep.subr.mxu0 0.0
  %190 = vmatpush1.msra.mxu0 0.0
  %191 = vmatprep.subr.mxu0 0.0
  %192 = vmatpush1.msra.mxu0 0.0
  %193 = vmatprep.mubr.f32.mxu0 0.0
  %194 = vmatmul.mubr.f32.gmra.mrb[0].mxu0 %v113
  %v195 = vpop.f32.mrb[0].mxu0
  %v196 = vadd.f32 0.0, %v195
  %v197 = vpop.f32.mrb[0].mxu0
  %198 = vmatprep.mubr.f32.mxu0 0.0
  %199 = vmatmul.mubr.f32.gmra.mrb[0].mxu0 %v114
  %v200 = vpop.f32.mrb[0].mxu0
  %v201 = vadd.f32 0.0, %v200
  %v202 = vpop.f32.mrb[0].mxu0
  %203 = vmatprep.mubr.f32.mxu0 0.0
  %204 = vmatmul.mubr.f32.gmra.mrb[0].mxu0 %v115
  %v205 = vpop.f32.mrb[0].mxu0
  %v206 = vadd.f32 0.0, %v205
  %v207 = vpop.f32.mrb[0].mxu0
  %208 = vmatprep.mubr.f32.mxu0 0.0
  %209 = vmatmul.mubr.f32.gmra.mrb[0].mxu0 %v116
  %v210 = vpop.f32.mrb[0].mxu0
  %v211 = vadd.f32 0.0, %v210
  %v212 = vpop.f32.mrb[0].mxu0
  %213 = vdwg.mxu0
  %v214 = vadd.f32 %v93, %v196
  %v215 = vadd.f32 %v94, %v201
  %v216 = vadd.f32 %v95, %v206
  %v217 = vadd.f32 %v96, %v211
  %vm218 = vcmask 261120
  %219 = vst.msk [vmem:[%s52] sm:$0xff] %vm218, %v214
  %220 = vst.msk [vmem:[%s52 + $0x8] sm:$0xff] %vm218, %v215
  %221 = vst.msk [vmem:[%s52 + $0x10] sm:$0xff] %vm218, %v216
  %222 = vst.msk [vmem:[%s52 + $0x18] sm:$0xff] %vm218, %v217
  %v223 = vmul.f32 %v77, %v77
  %v224 = vmul.f32 %v78, %v78
  %v225 = vmul.f32 %v79, %v79
  %v226 = vmul.f32 %v80, %v80
  %v227 = vmul.f32 %v81, %v81
  %v228 = vmul.f32 %v82, %v82
  %v229 = vmul.f32 %v83, %v83
  %v230 = vmul.f32 %v84, %v84
  %v231 = vmul.f32 %v85, %v85
  %v232 = vmul.f32 %v86, %v86
  %v233 = vmul.f32 %v87, %v87
  %v234 = vmul.f32 %v88, %v88
  %v235 = vmul.f32 %v89, %v89
  %v236 = vmul.f32 %v90, %v90
  %v237 = vmul.f32 %v91, %v91
  %v238 = vmul.f32 %v92, %v92
  %v239 = vld [vmem:[%s61] sm:$0xff]
  %v240 = vld [vmem:[%s61 + $0x8] sm:$0xff]
  %v241 = vld [vmem:[%s61 + $0x10] sm:$0xff]
  %v242 = vld [vmem:[%s61 + $0x18] sm:$0xff]
  %243 = vxpose.xlu0.b32.start [1/16] %v223, 128
  %244 = vxpose.xlu0.b32.cont [2/16] %v224, 128
  %245 = vxpose.xlu0.b32.cont [3/16] %v225, 128
  %246 = vxpose.xlu0.b32.cont [4/16] %v226, 128
  %247 = vxpose.xlu0.b32.cont [5/16] %v227, 128
  %248 = vxpose.xlu0.b32.cont [6/16] %v228, 128
  %249 = vxpose.xlu0.b32.cont [7/16] %v229, 128
  %250 = vxpose.xlu0.b32.cont [8/16] %v230, 128
  %251 = vxpose.xlu0.b32.cont [9/16] %v231, 128
  %252 = vxpose.xlu0.b32.cont [10/16] %v232, 128
  %253 = vxpose.xlu0.b32.cont [11/16] %v233, 128
  %254 = vxpose.xlu0.b32.cont [12/16] %v234, 128
  %255 = vxpose.xlu0.b32.cont [13/16] %v235, 128
  %256 = vxpose.xlu0.b32.cont [14/16] %v236, 128
  %257 = vxpose.xlu0.b32.cont [15/16] %v237, 128
  %258 = vxpose.xlu0.b32.end [16/16] %v238, 128
  %v259 = vpop.trf.xlu0
  %v260 = vpop.trf.xlu0
  %v261 = vpop.trf.xlu0
  %v262 = vpop.trf.xlu0
  %v263 = vpop.trf.xlu0
  %v264 = vpop.trf.xlu0
  %v265 = vpop.trf.xlu0
  %v266 = vpop.trf.xlu0
  %v267 = vpop.trf.xlu0
  %v268 = vpop.trf.xlu0
  %v269 = vpop.trf.xlu0
  %v270 = vpop.trf.xlu0
  %v271 = vpop.trf.xlu0
  %v272 = vpop.trf.xlu0
  %v273 = vpop.trf.xlu0
  %v274 = vpop.trf.xlu0
  %275 = vmatprep.subr.mxu0 0.0
  %276 = vmatpush1.msra.mxu0 %v223
  %277 = vmatprep.subr.mxu0 0.0
  %278 = vmatpush1.msra.mxu0 %v224
  %279 = vmatprep.subr.mxu0 0.0
  %280 = vmatpush1.msra.mxu0 %v225
  %281 = vmatprep.subr.mxu0 0.0
  %282 = vmatpush1.msra.mxu0 %v226
  %283 = vmatprep.subr.mxu0 0.0
  %284 = vmatpush1.msra.mxu0 %v227
  %285 = vmatprep.subr.mxu0 0.0
  %286 = vmatpush1.msra.mxu0 %v228
  %287 = vmatprep.subr.mxu0 0.0
  %288 = vmatpush1.msra.mxu0 %v229
  %289 = vmatprep.subr.mxu0 0.0
  %290 = vmatpush1.msra.mxu0 %v230
  %291 = vmatprep.subr.mxu0 0.0
  %292 = vmatpush1.msra.mxu0 %v231
  %293 = vmatprep.subr.mxu0 0.0
  %294 = vmatpush1.msra.mxu0 %v232
  %295 = vmatprep.subr.mxu0 0.0
  %296 = vmatpush1.msra.mxu0 %v233
  %297 = vmatprep.subr.mxu0 0.0
  %298 = vmatpush1.msra.mxu0 %v234
  %299 = vmatprep.subr.mxu0 0.0
  %300 = vmatpush1.msra.mxu0 %v235
  %301 = vmatprep.subr.mxu0 0.0
  %302 = vmatpush1.msra.mxu0 %v236
  %303 = vmatprep.subr.mxu0 0.0
  %304 = vmatpush1.msra.mxu0 %v237
  %305 = vmatprep.subr.mxu0 0.0
  %306 = vmatpush1.msra.mxu0 %v238
  %307 = vmatprep.subr.mxu0 0.0
  %308 = vmatpush1.msra.mxu0 0.0
  %309 = vmatprep.subr.mxu0 0.0
  %310 = vmatpush1.msra.mxu0 0.0
  %311 = vmatprep.subr.mxu0 0.0
  %312 = vmatpush1.msra.mxu0 0.0
  %313 = vmatprep.subr.mxu0 0.0
  %314 = vmatpush1.msra.mxu0 0.0
  %315 = vmatprep.subr.mxu0 0.0
  %316 = vmatpush1.msra.mxu0 0.0
  %317 = vmatprep.subr.mxu0 0.0
  %318 = vmatpush1.msra.mxu0 0.0
  %319 = vmatprep.subr.mxu0 0.0
  %320 = vmatpush1.msra.mxu0 0.0
  %321 = vmatprep.subr.mxu0 0.0
  %322 = vmatpush1.msra.mxu0 0.0
  %323 = vmatprep.subr.mxu0 0.0
  %324 = vmatpush1.msra.mxu0 0.0
  %325 = vmatprep.subr.mxu0 0.0
  %326 = vmatpush1.msra.mxu0 0.0
  %327 = vmatprep.subr.mxu0 0.0
  %328 = vmatpush1.msra.mxu0 0.0
  %329 = vmatprep.subr.mxu0 0.0
  %330 = vmatpush1.msra.mxu0 0.0
  %331 = vmatprep.subr.mxu0 0.0
  %332 = vmatpush1.msra.mxu0 0.0
  %333 = vmatprep.subr.mxu0 0.0
  %334 = vmatpush1.msra.mxu0 0.0
  %335 = vmatprep.subr.mxu0 0.0
  %336 = vmatpush1.msra.mxu0 0.0
  %337 = vmatprep.subr.mxu0 0.0
  %338 = vmatpush1.msra.mxu0 0.0
  %339 = vmatprep.mubr.f32.mxu0 0.0
  %340 = vmatmul.mubr.f32.gmra.mrb[0].mxu0 %v259
  %v341 = vpop.f32.mrb[0].mxu0
  %v342 = vadd.f32 0.0, %v341
  %v343 = vpop.f32.mrb[0].mxu0
  %344 = vmatprep.mubr.f32.mxu0 0.0
  %345 = vmatmul.mubr.f32.gmra.mrb[0].mxu0 %v260
  %v346 = vpop.f32.mrb[0].mxu0
  %v347 = vadd.f32 0.0, %v346
  %v348 = vpop.f32.mrb[0].mxu0
  %349 = vmatprep.mubr.f32.mxu0 0.0
  %350 = vmatmul.mubr.f32.gmra.mrb[0].mxu0 %v261
  %v351 = vpop.f32.mrb[0].mxu0
  %v352 = vadd.f32 0.0, %v351
  %v353 = vpop.f32.mrb[0].mxu0
  %354 = vmatprep.mubr.f32.mxu0 0.0
  %355 = vmatmul.mubr.f32.gmra.mrb[0].mxu0 %v262
  %v356 = vpop.f32.mrb[0].mxu0
  %v357 = vadd.f32 0.0, %v356
  %v358 = vpop.f32.mrb[0].mxu0
  %359 = vdwg.mxu0
  %v360 = vadd.f32 %v239, %v342
  %v361 = vadd.f32 %v240, %v347
  %v362 = vadd.f32 %v241, %v352
  %v363 = vadd.f32 %v242, %v357
  %364 = vst.msk [vmem:[%s61] sm:$0xff] %vm218, %v360
  %365 = vst.msk [vmem:[%s61 + $0x8] sm:$0xff] %vm218, %v361
  %366 = vst.msk [vmem:[%s61 + $0x10] sm:$0xff] %vm218, %v362
  %367 = vst.msk [vmem:[%s61 + $0x18] sm:$0xff] %vm218, %v363
  %s368 = sadd.s32 0, 0
  %s369 = sadd.s32 %s368, 0
  %p370 = scmp.lt.s32.totalorder %s369, 0
  %s371 = scalar_select %p370, %s369, 0
  %s372 = smul.addr %s371, 4
  %s373 = smul.addr %s372, 8
  %s374 = scalar_lea.vmem %s1, %s373
  %s375 = sadd.s32 0, 0
  %s376 = sadd.s32 %s375, 0
  %p377 = scmp.lt.s32.totalorder %s376, 0
  %s378 = scalar_select %p377, %s376, 0
  %s379 = smul.addr %s378, 4
  %s380 = smul.addr %s379, 8
  %s381 = scalar_lea.vmem %s2, %s380
  // Predicated region
  $region10: #{decorr_loss.1} parent=0 // pred_check
    _
  $region11: #{decorr_loss.1} parent=0 // pred_check_branch
    %383 = sbr.rel (0) target = $region13
  $region12: #{decorr_loss.1} parent=0 // pred_region
    %s384 = sadd.s32 0, 0
    %s385 = sadd.s32 %s384, 0
  $region13: #{decorr_loss.1} parent=0 // pred_fallthru
    _
  // Predicated region
  $region14: #{decorr_loss.1} parent=0 // pred_check
    _
  $region15: #{decorr_loss.1} parent=0 // pred_check_branch
    %387 = sbr.rel (0) target = $region17
  $region16: #{decorr_loss.1} parent=0 // pred_region
    %s388 = sadd.s32 0, 0
    %s389 = sadd.s32 %s388, 0
  $region17: #{decorr_loss.1} parent=0 // pred_fallthru
    _
  // Predicated region
  $region18: #{decorr_loss.1} parent=0 // pred_check
    _
  $region19: #{decorr_loss.1} parent=0 // pred_check_branch
    %391 = sbr.rel (0) target = $region21
  $region20: #{decorr_loss.1} parent=0 // pred_region
    %s392 = sadd.s32 0, 0
    %s393 = sadd.s32 %s392, 0
    %p394 = scmp.lt.s32.totalorder %s393, 0
    %s395 = scalar_select %p394, %s393, 0
    %s396 = smul.addr %s395, 4
    %s397 = smul.addr %s396, 8
    %s398 = scalar_lea.vmem %s1, %s397
  $region21: #{decorr_loss.1} parent=0 // pred_fallthru
    _
  // Predicated region
  $region22: #{decorr_loss.1} parent=0 // pred_check
    _
  $region23: #{decorr_loss.1} parent=0 // pred_check_branch
    %400 = sbr.rel (0) target = $region25
  $region24: #{decorr_loss.1} parent=0 // pred_region
    %s401 = sadd.s32 0, 0
    %s402 = sadd.s32 %s401, 0
    %p403 = scmp.lt.s32.totalorder %s402, 0
    %s404 = scalar_select %p403, %s402, 0
    %s405 = smul.addr %s404, 4
    %s406 = smul.addr %s405, 8
    %s407 = scalar_lea.vmem %s2, %s406
  $region25: #{decorr_loss.1} parent=0 // pred_fallthru
    _

</llo_original>
